<compile_context>
chip_gen: v6e
topology: v6e:2x2x1
jax: 0.10.0
libtpu: 0.0.40
codegen_flags: <defaults>
</compile_context>

<pallas_src>
import jax
import jax.numpy as jnp
from jax.experimental import pallas as pl
from jax.experimental.pallas import tpu as pltpu


C_PAD = 128          # lane-dense logits width (multiple of 128)
H1, H2 = 512, 256    # hidden sizes of fc1 / fc2 (fixed by the reference module)


def mlp_kernel(x_ref, w1_ref, w23_ref, b_ref, o_ref):
    # This grid step's batch tile; cast to bf16 only as MXU input.
    x = x_ref[...].astype(jnp.bfloat16)

    # fc1: (TM, D) @ (D, 512), f32 accumulate, f32 bias+ReLU.
    h1 = jnp.dot(x, w1_ref[...], preferred_element_type=jnp.float32) + b_ref[0:1, :H1]
    h1 = jnp.maximum(h1, 0.0)

    # fc2: rows [0:512) of the packed weight buffer, full 256 lanes.
    h2 = (
        jnp.dot(h1.astype(jnp.bfloat16), w23_ref[0:H1, :],
                preferred_element_type=jnp.float32)
        + b_ref[1:2, :H2]
    )
    h2 = jnp.maximum(h2, 0.0)

    # fc3: rows [512:768) of the packed buffer; only the first C_PAD=128 lanes
    # are real (cols 128..255 are stacking padding), so slice them statically.
    h3 = (
        jnp.dot(h2.astype(jnp.bfloat16), w23_ref[H1:H1 + H2, :C_PAD],
                preferred_element_type=jnp.float32)
        + b_ref[2:3, :C_PAD]
    )
    h3 = jnp.maximum(h3, 0.0)  # the reference module applies ReLU to the last layer too

    # (TM, 128): lane-dense, unmasked store.  Columns >= n_classes are exactly 0
    # (zero-padded w3/b3 -> relu(0) = 0); intentional, do NOT "fix" the padding.
    o_ref[...] = h3.astype(o_ref.dtype)


def prepare_mlp_params(params):
    """One-time packing: bf16-cast weights, pad fc3 to a lane-dense width, and
    pack everything into 3 buffers (w1 bf16, [w2;w3] bf16, biases f32).

    Call ONCE at init and reuse the result for every forward call.
    params: (w1, b1, w2, b2, w3, b3) with each w laid out as (in_features, out_features).
    """
    w1, b1, w2, b2, w3, b3 = params
    D = w1.shape[0]
    assert w1.shape == (D, H1) and w2.shape == (H1, H2)
    K3, C = w3.shape
    assert K3 == H2 and C <= C_PAD

    w1b = w1.astype(jnp.bfloat16)                                   # (D, 512)

    # fc3 zero-padded to H2(=256) columns (covers the C->128 lane-dense padding
    # too) so it can be stacked under fc2 in a single (768, 256) bf16 buffer.
    w3_pad = jnp.zeros((H2, H2), jnp.float32).at[:, :C].set(w3)
    w23b = jnp.concatenate([w2, w3_pad], axis=0).astype(jnp.bfloat16)  # (768, 256)

    # All three biases packed into one tiny f32 buffer, one row per layer.
    bpack = jnp.zeros((3, H1), jnp.float32)
    bpack = bpack.at[0, :H1].set(b1.reshape(-1))
    bpack = bpack.at[1, :H2].set(b2.reshape(-1))
    bpack = bpack.at[2, :C].set(b3.reshape(-1))

    return (w1b, w23b, bpack)


def mlp_forward(x, prepared, *, row_tile=256):
    """x: (N, D) f32.  prepared: output of prepare_mlp_params().

    Returns lane-dense logits of shape (N, C_PAD); columns >= n_classes are 0.
    Slice [:, :n_classes] at the consumer (kept out of this wrapper so the
    steady-state call is a single kernel launch).
    """
    w1b, w23b, bpack = prepared
    N, D = x.shape
    assert w1b.shape[0] == D

    # Batch tiling: one grid step per row_tile rows; "parallel" lets v7x split
    # tiles across its two TensorCores.  Small batches run as one step with
    # block == full array (no (8,128) divisibility requirement in that case).
    if N >= row_tile:
        tm = row_tile
        n_rows = pl.cdiv(N, tm) * tm
        if n_rows != N:
            x = jnp.pad(x, ((0, n_rows - N), (0, 0)))
    else:
        tm, n_rows = N, N
    grid = (n_rows // tm,)

    # TODO(synk): for repeated per-token calls, a cross-pallas_call weight
    # prefetch (semaphore + VMEM-ref outputs) would hide even the one-time
    # ~450 KiB weight DMA behind preceding work; not needed at this scale.
    out = pl.pallas_call(
        mlp_kernel,
        out_shape=jax.ShapeDtypeStruct((n_rows, C_PAD), jnp.float32),
        grid=grid,
        in_specs=[
            pl.BlockSpec((tm, D), lambda i: (i, 0)),        # x: per batch tile
            pl.BlockSpec(w1b.shape, lambda i: (0, 0)),      # weights/biases: constant
            pl.BlockSpec(w23b.shape, lambda i: (0, 0)),     #   block index -> fetched
            pl.BlockSpec(bpack.shape, lambda i: (0, 0)),    #   once, VMEM-resident
        ],
        out_specs=pl.BlockSpec((tm, C_PAD), lambda i: (i, 0)),
        compiler_params=pltpu.CompilerParams(
            dimension_semantics=("parallel",),
            vmem_limit_bytes=32 * 1024 * 1024,  # explicit budget; footprint ~1 MiB
        ),
    )(x, w1b, w23b, bpack)

    return out[:N] if n_rows != N else out


def init_linear(key, fan_in, fan_out):
    # PyTorch nn.Linear default init: U(-1/sqrt(fan_in), 1/sqrt(fan_in)).
    kw, kb = jax.random.split(key)
    bound = 1.0 / jnp.sqrt(float(fan_in))
    w = jax.random.uniform(kw, (fan_in, fan_out), jnp.float32, -bound, bound)
    b = jax.random.uniform(kb, (1, fan_out), jnp.float32, -bound, bound)
    return w, b


def ref_forward(x, params):
    """Pure-JAX reference mirroring the kernel's bf16-input / f32-accumulate math."""
    (w1, b1, w2, b2, w3, b3) = params
    h = x.astype(jnp.bfloat16)
    h = jnp.maximum(
        jnp.dot(h, w1.astype(jnp.bfloat16), preferred_element_type=jnp.float32) + b1, 0.0
    )
    h = jnp.maximum(
        jnp.dot(h.astype(jnp.bfloat16), w2.astype(jnp.bfloat16),
                preferred_element_type=jnp.float32) + b2, 0.0
    )
    h = jnp.maximum(
        jnp.dot(h.astype(jnp.bfloat16), w3.astype(jnp.bfloat16),
                preferred_element_type=jnp.float32) + b3, 0.0
    )
    return h


if __name__ == "__main__":
    key = jax.random.PRNGKey(0)
    k_x, k1, k2, k3 = jax.random.split(key, 4)

    N = 8            # batch
    input_size = 64  # D
    n_classes = 10   # C

    x = jax.random.normal(k_x, (N, input_size), jnp.float32)

    w1, b1 = init_linear(k1, input_size, 512)
    w2, b2 = init_linear(k2, 512, 256)
    w3, b3 = init_linear(k3, 256, n_classes)
    params = (w1, b1, w2, b2, w3, b3)

    # One-time packing (hoisted out of the per-call path).
    prepared = jax.block_until_ready(prepare_mlp_params(params))

    fwd = jax.jit(mlp_forward)
    out_padded = jax.block_until_ready(fwd(x, prepared))
    assert out_padded.shape == (N, C_PAD)

    # Padded logit columns are exactly zero by construction.
    assert jnp.all(out_padded[:, n_classes:] == 0.0)

    # Consumer-side slice down to the module's (N, C) logits.
    out = out_padded[:, :n_classes]
    assert out.shape == (N, n_classes)

    # Check against the bf16-mirrored reference (tight) ...
    ref_bf16 = ref_forward(x, params)
    assert jnp.allclose(out, ref_bf16, atol=1e-2, rtol=1e-2)

    # ... and sanity-check against the full-f32 PyTorch-equivalent reference
    # (loose: bf16 weight quantization, K <= 512 keeps it well within 5e-2).
    ref_f32 = x
    for w, b in ((w1, b1), (w2, b2), (w3, b3)):
        ref_f32 = jnp.maximum(ref_f32 @ w + b, 0.0)
    assert jnp.allclose(out, ref_f32, atol=5e-2, rtol=5e-2)

    print("KERNEL_OK")
</pallas_src>

<mosaic_0001>
module attributes {stable_mosaic.version = 11 : i64} {
  func.func @mlp_kernel(%arg0: i32, %arg1: memref<8x64xf32, #tpu.memory_space<vmem>>, %arg2: memref<64x512xbf16, #tpu.memory_space<vmem>>, %arg3: memref<768x256xbf16, #tpu.memory_space<vmem>>, %arg4: memref<3x512xf32, #tpu.memory_space<vmem>>, %arg5: memref<8x128xf32, #tpu.memory_space<vmem>>) attributes {dimension_semantics = [#tpu.dimension_semantics<parallel>], iteration_bounds = array<i64: 1>, scalar_prefetch = 0 : i64, scratch_operands = 0 : i64, tpu.core_type = #tpu.core_type<tc>, window_params = [{transform_indices = @transform_0, window_bounds = array<i64: 8, 64>}, {pipeline_mode = #tpu.pipeline_mode<synchronous>, transform_indices = @transform_1, window_bounds = array<i64: 64, 512>}, {pipeline_mode = #tpu.pipeline_mode<synchronous>, transform_indices = @transform_2, window_bounds = array<i64: 768, 256>}, {pipeline_mode = #tpu.pipeline_mode<synchronous>, transform_indices = @transform_3, window_bounds = array<i64: 3, 512>}, {transform_indices = @transform_4, window_bounds = array<i64: 8, 128>}]} {
    %c0 = arith.constant 0 : index
    %c0_0 = arith.constant 0 : index
    %0 = vector.load %arg1[%c0, %c0_0] : memref<8x64xf32, #tpu.memory_space<vmem>>, vector<8x64xf32>
    %1 = arith.truncf %0 : vector<8x64xf32> to vector<8x64xbf16>
    %c0_1 = arith.constant 0 : index
    %c0_2 = arith.constant 0 : index
    %2 = vector.load %arg2[%c0_1, %c0_2] : memref<64x512xbf16, #tpu.memory_space<vmem>>, vector<64x512xbf16>
    %cst = arith.constant dense<0.000000e+00> : vector<8x512xf32>
    %3 = tpu.matmul %1, %2, %cst {dimension_numbers = #tpu.dot_dimension_numbers<[1], [0], [0], [1], [0, 0, 1, 1], [], []>} : vector<8x64xbf16>, vector<64x512xbf16>, vector<8x512xf32> -> vector<8x512xf32>
    %c0_3 = arith.constant 0 : index
    %c0_4 = arith.constant 0 : index
    %4 = vector.load %arg4[%c0_3, %c0_4] : memref<3x512xf32, #tpu.memory_space<vmem>>, vector<1x512xf32>
    %5 = vector.broadcast %4 : vector<1x512xf32> to vector<8x512xf32>
    %6 = arith.addf %3, %5 : vector<8x512xf32>
    %cst_5 = arith.constant 0.000000e+00 : f32
    %7 = vector.broadcast %cst_5 : f32 to vector<8x512xf32>
    %8 = arith.maximumf %6, %7 : vector<8x512xf32>
    %9 = arith.truncf %8 : vector<8x512xf32> to vector<8x512xbf16>
    %c0_6 = arith.constant 0 : index
    %c0_7 = arith.constant 0 : index
    %10 = vector.load %arg3[%c0_6, %c0_7] : memref<768x256xbf16, #tpu.memory_space<vmem>>, vector<512x256xbf16>
    %cst_8 = arith.constant dense<0.000000e+00> : vector<8x256xf32>
    %11 = tpu.matmul %9, %10, %cst_8 {dimension_numbers = #tpu.dot_dimension_numbers<[1], [0], [0], [1], [0, 0, 1, 1], [], []>} : vector<8x512xbf16>, vector<512x256xbf16>, vector<8x256xf32> -> vector<8x256xf32>
    %c1 = arith.constant 1 : index
    %c0_9 = arith.constant 0 : index
    %12 = vector.load %arg4[%c1, %c0_9] : memref<3x512xf32, #tpu.memory_space<vmem>>, vector<1x256xf32>
    %13 = vector.broadcast %12 : vector<1x256xf32> to vector<8x256xf32>
    %14 = arith.addf %11, %13 : vector<8x256xf32>
    %cst_10 = arith.constant 0.000000e+00 : f32
    %15 = vector.broadcast %cst_10 : f32 to vector<8x256xf32>
    %16 = arith.maximumf %14, %15 : vector<8x256xf32>
    %17 = arith.truncf %16 : vector<8x256xf32> to vector<8x256xbf16>
    %c512 = arith.constant 512 : index
    %c0_11 = arith.constant 0 : index
    %18 = vector.load %arg3[%c512, %c0_11] : memref<768x256xbf16, #tpu.memory_space<vmem>>, vector<256x128xbf16>
    %cst_12 = arith.constant dense<0.000000e+00> : vector<8x128xf32>
    %19 = tpu.matmul %17, %18, %cst_12 {dimension_numbers = #tpu.dot_dimension_numbers<[1], [0], [0], [1], [0, 0, 1, 1], [], []>} : vector<8x256xbf16>, vector<256x128xbf16>, vector<8x128xf32> -> vector<8x128xf32>
    %c2 = arith.constant 2 : index
    %c0_13 = arith.constant 0 : index
    %20 = vector.load %arg4[%c2, %c0_13] : memref<3x512xf32, #tpu.memory_space<vmem>>, vector<1x128xf32>
    %21 = vector.broadcast %20 : vector<1x128xf32> to vector<8x128xf32>
    %22 = arith.addf %19, %21 : vector<8x128xf32>
    %cst_14 = arith.constant 0.000000e+00 : f32
    %23 = vector.broadcast %cst_14 : f32 to vector<8x128xf32>
    %24 = arith.maximumf %22, %23 : vector<8x128xf32>
    %c0_15 = arith.constant 0 : index
    %c0_16 = arith.constant 0 : index
    %25 = vector.load %arg5[%c0_15, %c0_16] : memref<8x128xf32, #tpu.memory_space<vmem>>, vector<8x128xf32>
    tpu.vector_store %arg5[%c0_15, %c0_16], %24 {strides = array<i32>} : memref<8x128xf32, #tpu.memory_space<vmem>>, vector<8x128xf32>,
    return
  }
  func.func @transform_0(%arg0: i32) -> (i32, i32) {
    %c0_i32 = arith.constant 0 : i32
    %c0_i32_0 = arith.constant 0 : i32
    return %arg0, %c0_i32 : i32, i32
  }
  func.func @transform_1(%arg0: i32) -> (i32, i32) {
    %c0_i32 = arith.constant 0 : i32
    %c0_i32_0 = arith.constant 0 : i32
    %c0_i32_1 = arith.constant 0 : i32
    return %c0_i32, %c0_i32_0 : i32, i32
  }
  func.func @transform_2(%arg0: i32) -> (i32, i32) {
    %c0_i32 = arith.constant 0 : i32
    %c0_i32_0 = arith.constant 0 : i32
    %c0_i32_1 = arith.constant 0 : i32
    return %c0_i32, %c0_i32_0 : i32, i32
  }
  func.func @transform_3(%arg0: i32) -> (i32, i32) {
    %c0_i32 = arith.constant 0 : i32
    %c0_i32_0 = arith.constant 0 : i32
    %c0_i32_1 = arith.constant 0 : i32
    return %c0_i32, %c0_i32_0 : i32, i32
  }
  func.func @transform_4(%arg0: i32) -> (i32, i32) {
    %c0_i32 = arith.constant 0 : i32
    %c0_i32_0 = arith.constant 0 : i32
    return %arg0, %c0_i32 : i32, i32
  }
}

</mosaic_0001>

<llo_original>
// kernel: mlp_forward.1
$region0: #{mlp_forward.1}
  #allocation0 [shape = 'u32[]', space=smem, size = 0x4, offset = 0x4, fixed_abs, tag = 'smem constant byte address 0x4 - core index']
  #allocation1 [shape = 'u32[144,128]{1,0:T(1,128)}', space=vmem, size = 0x12000, scoped, tag = 'internal scratch']
  %s0 = inlined_call_operand.hbm [shape: f32[8,64], index: 0, kind: input, shape index: {}]
  %s1 = inlined_call_operand.hbm [shape: bf16[64,512], index: 1, kind: input, shape index: {}]
  %s2 = inlined_call_operand.hbm [shape: bf16[768,256], index: 2, kind: input, shape index: {}]
  %s3 = inlined_call_operand.hbm [shape: f32[3,512], index: 3, kind: input, shape index: {}]
  %s4 = inlined_call_operand.hbm [shape: f32[8,128], index: 4, kind: output, shape index: {}]
  %s5 = sld [smem:[#allocation0]]
  $region42: #{mlp_forward.1} parent=0
    _
  %s7 = ssub.s32 1, %s5
  %s8 = scalar_select 0, %s7, %s5
  $region1: #{mlp_forward.1} parent=0
    #allocation2 [shape = 'u8[4096]{0}', space=vmem, size = 0x1000, scoped, tag = 'input window, operand 0, single buffered']
    #allocation3 [shape = 's32[1]{0}', space=sflag, size = 0x4, scoped, tag = 'scoped memory for mlp_forward.1']
    #allocation4 [shape = 's32[1]{0}', space=sflag, size = 0x4, scoped, tag = 'scoped memory for mlp_forward.1']
    #allocation5 [shape = 'u8[65536]{0}', space=vmem, size = 0x10000, scoped, tag = 'input window, operand 1, single buffered']
    #allocation6 [shape = 's32[1]{0}', space=sflag, size = 0x4, scoped, tag = 'scoped memory for mlp_forward.1']
    #allocation7 [shape = 'u8[393216]{0}', space=vmem, size = 0x60000, scoped, tag = 'input window, operand 2, single buffered']
    #allocation8 [shape = 'u8[8192]{0}', space=vmem, size = 0x2000, scoped, tag = 'input window, operand 3, single buffered']
    #allocation9 [shape = 's32[1]{0}', space=sflag, size = 0x4, scoped, tag = 'scoped memory for mlp_forward.1']
    #allocation10 [shape = 'u8[4096]{0}', space=vmem, size = 0x1000, scoped, tag = 'output window, operand 0, single buffered']
    %9 = vsyncpa [#allocation3], 0
    %10 = vsyncpa [#allocation6], 0
    %11 = vsyncpa [#allocation9], 0
    %12 = vsyncpa [#allocation4], 0
    // Predicated region
    $region2: #{mlp_forward.1} parent=1 // pred_check
      _
    $region3: #{mlp_forward.1} parent=1 // pred_check_branch
      %14 = sbr.rel (0) target = $region5
    $region4: #{mlp_forward.1} parent=1 // pred_region
      %s16 = ssub.s32 128, 128
      %17 = vsyncadd [#allocation3], %s16
      %s19 = sshll.u32 [#allocation2], 4
      %s20 = int_to_ptr.vmem [resolvable:$true] %s19
      %22 = dma.hbm_to_vmem [thread:$0]  %s0, 128, %s20, [#allocation3]
    $region5: #{mlp_forward.1} parent=1 // pred_fallthru
      _
    // Predicated region
    $region6: #{mlp_forward.1} parent=1 // pred_check
      _
    $region7: #{mlp_forward.1} parent=1 // pred_check_branch
      %24 = sbr.rel (0) target = $region9
    $region8: #{mlp_forward.1} parent=1 // pred_region
      %s26 = ssub.s32 2048, 2048
      %27 = vsyncadd [#allocation6], %s26
      %s28 = sshll.u32 [#allocation5], 4
      %s29 = int_to_ptr.vmem [resolvable:$true] %s28
      %34 = dma.hbm_to_vmem [thread:$0]  %s1, 2048, %s29, [#allocation6], 256, 256, 16
    $region9: #{mlp_forward.1} parent=1 // pred_fallthru
      _
    // Predicated region
    $region10: #{mlp_forward.1} parent=1 // pred_check
      _
    $region11: #{mlp_forward.1} parent=1 // pred_check_branch
      %36 = sbr.rel (0) target = $region13
    $region12: #{mlp_forward.1} parent=1 // pred_region
      %s38 = ssub.s32 12288, 12288
      %39 = vsyncadd [#allocation6], %s38
      %s40 = sshll.u32 [#allocation7], 4
      %s41 = int_to_ptr.vmem [resolvable:$true] %s40
      %46 = dma.hbm_to_vmem [thread:$0]  %s2, 12288, %s41, [#allocation6], 128, 128, 8
    $region13: #{mlp_forward.1} parent=1 // pred_fallthru
      _
    // Predicated region
    $region14: #{mlp_forward.1} parent=1 // pred_check
      _
    $region15: #{mlp_forward.1} parent=1 // pred_check_branch
      %48 = sbr.rel (0) target = $region17
    $region16: #{mlp_forward.1} parent=1 // pred_region
      %s50 = ssub.s32 256, 256
      %51 = vsyncadd [#allocation9], %s50
      %s53 = sshll.u32 [#allocation8], 4
      %s54 = int_to_ptr.vmem [resolvable:$true] %s53
      %56 = dma.hbm_to_vmem [thread:$0]  %s3, 256, %s54, [#allocation9]
    $region17: #{mlp_forward.1} parent=1 // pred_fallthru
      _
    // Predicated region
    $region18: #{mlp_forward.1} parent=1 // pred_check
      _
    $region19: #{mlp_forward.1} parent=1 // pred_check_branch
      %58 = sbr.rel (0) target = $region21
    $region20: #{mlp_forward.1} parent=1 // pred_region
      %59 = dma.done [#allocation3], 128
    $region21: #{mlp_forward.1} parent=1 // pred_fallthru
      _
    // Predicated region
    $region22: #{mlp_forward.1} parent=1 // pred_check
      _
    $region23: #{mlp_forward.1} parent=1 // pred_check_branch
      %61 = sbr.rel (0) target = $region25
    $region24: #{mlp_forward.1} parent=1 // pred_region
      %62 = dma.done [#allocation6], 2048
    $region25: #{mlp_forward.1} parent=1 // pred_fallthru
      _
    // Predicated region
    $region26: #{mlp_forward.1} parent=1 // pred_check
      _
    $region27: #{mlp_forward.1} parent=1 // pred_check_branch
      %64 = sbr.rel (0) target = $region29
    $region28: #{mlp_forward.1} parent=1 // pred_region
      %65 = dma.done [#allocation6], 12288
    $region29: #{mlp_forward.1} parent=1 // pred_fallthru
      _
    // Predicated region
    $region30: #{mlp_forward.1} parent=1 // pred_check
      _
    $region31: #{mlp_forward.1} parent=1 // pred_check_branch
      %67 = sbr.rel (0) target = $region33
    $region32: #{mlp_forward.1} parent=1 // pred_region
      %68 = dma.done [#allocation9], 256
    $region33: #{mlp_forward.1} parent=1 // pred_fallthru
      _
    %v70 = vld [vmem:[#allocation2] sm:$0xff]
    %v71 = vpack.c.bf16 %v70, %v70
    %v72 = vld [vmem:[#allocation5] sm:$0xff]
    %v73 = vld [vmem:[#allocation5 + $0x8] sm:$0xff]
    %v74 = vld [vmem:[#allocation5 + $0x10] sm:$0xff]
    %v75 = vld [vmem:[#allocation5 + $0x18] sm:$0xff]
    %v76 = vld [vmem:[#allocation5 + $0x20] sm:$0xff]
    %v77 = vld [vmem:[#allocation5 + $0x28] sm:$0xff]
    %v78 = vld [vmem:[#allocation5 + $0x30] sm:$0xff]
    %v79 = vld [vmem:[#allocation5 + $0x38] sm:$0xff]
    %v80 = vld [vmem:[#allocation5 + $0x40] sm:$0xff]
    %v81 = vld [vmem:[#allocation5 + $0x48] sm:$0xff]
    %v82 = vld [vmem:[#allocation5 + $0x50] sm:$0xff]
    %v83 = vld [vmem:[#allocation5 + $0x58] sm:$0xff]
    %v84 = vld [vmem:[#allocation5 + $0x60] sm:$0xff]
    %v85 = vld [vmem:[#allocation5 + $0x68] sm:$0xff]
    %v86 = vld [vmem:[#allocation5 + $0x70] sm:$0xff]
    %v87 = vld [vmem:[#allocation5 + $0x78] sm:$0xff]
    %v88 = vld [vmem:[#allocation8] ss:$4 sm:$0xf]
    %v90 = vlaneseq
    %v91 = vshrl.u32 %v90, 7
    %v92 = vsub.s32 0, %v91
    %v93 = vrot.slane %v88, %v92
    %v94 = vlaneseq
    %v95 = vshrl.u32 %v94, 7
    %v96 = vsub.s32 1, %v95
    %v97 = vrot.slane %v88, %v96
    %v98 = vlaneseq
    %v99 = vshrl.u32 %v98, 7
    %v100 = vsub.s32 2, %v99
    %v101 = vrot.slane %v88, %v100
    %v102 = vlaneseq
    %v103 = vshrl.u32 %v102, 7
    %v104 = vsub.s32 3, %v103
    %v105 = vrot.slane %v88, %v104
    %v126 = vunpack.c.l.b16 %v72
    %v127 = vunpack.c.h.b16 %v72
    %v128 = vunpack.c.l.b16 %v73
    %v129 = vunpack.c.h.b16 %v73
    %v130 = vunpack.c.l.b16 %v74
    %v131 = vunpack.c.h.b16 %v74
    %v132 = vunpack.c.l.b16 %v75
    %v133 = vunpack.c.h.b16 %v75
    %v134 = vunpack.c.l.b16 %v76
    %v135 = vunpack.c.h.b16 %v76
    %v136 = vunpack.c.l.b16 %v77
    %v137 = vunpack.c.h.b16 %v77
    %v138 = vunpack.c.l.b16 %v78
    %v139 = vunpack.c.h.b16 %v78
    %v140 = vunpack.c.l.b16 %v79
    %v141 = vunpack.c.h.b16 %v79
    %v142 = vunpack.c.l.b16 %v80
    %v143 = vunpack.c.h.b16 %v80
    %v144 = vunpack.c.l.b16 %v81
    %v145 = vunpack.c.h.b16 %v81
    %v146 = vunpack.c.l.b16 %v82
    %v147 = vunpack.c.h.b16 %v82
    %v148 = vunpack.c.l.b16 %v83
    %v149 = vunpack.c.h.b16 %v83
    %v150 = vunpack.c.l.b16 %v84
    %v151 = vunpack.c.h.b16 %v84
    %v152 = vunpack.c.l.b16 %v85
    %v153 = vunpack.c.h.b16 %v85
    %v154 = vunpack.c.l.b16 %v86
    %v155 = vunpack.c.h.b16 %v86
    %v156 = vunpack.c.l.b16 %v87
    %v157 = vunpack.c.h.b16 %v87
    %v158 = vpack.c.b16 %v130, %v126
    %v159 = vpack.c.b16 %v131, %v127
    %v160 = vpack.c.b16 %v132, %v128
    %v161 = vpack.c.b16 %v133, %v129
    %v162 = vpack.c.b16 %v138, %v134
    %v163 = vpack.c.b16 %v139, %v135
    %v164 = vpack.c.b16 %v140, %v136
    %v165 = vpack.c.b16 %v141, %v137
    %v166 = vpack.c.b16 %v146, %v142
    %v167 = vpack.c.b16 %v147, %v143
    %v168 = vpack.c.b16 %v148, %v144
    %v169 = vpack.c.b16 %v149, %v145
    %v170 = vpack.c.b16 %v154, %v150
    %v171 = vpack.c.b16 %v155, %v151
    %v172 = vpack.c.b16 %v156, %v152
    %v173 = vpack.c.b16 %v157, %v153
    %vm190 = vcmask 523264
    %v192 = vsel %vm190, %v71, 0
    %194 = vmatprep.subr.bf16.mxu0 0
    %195 = vmatpush1.bf16.msra.mxu0 0
    %196 = vmatprep.subr.bf16.mxu0 0
    %197 = vmatpush1.bf16.msra.mxu0 0
    %198 = vmatprep.subr.bf16.mxu0 0
    %199 = vmatpush1.bf16.msra.mxu0 0
    %200 = vmatprep.subr.bf16.mxu0 0
    %201 = vmatpush1.bf16.msra.mxu0 0
    %202 = vmatprep.subr.bf16.mxu0 %v171
    %203 = vmatpush1.bf16.msra.mxu0 %v170
    %204 = vmatprep.subr.bf16.mxu0 %v167
    %205 = vmatpush1.bf16.msra.mxu0 %v166
    %206 = vmatprep.subr.bf16.mxu0 %v163
    %207 = vmatpush1.bf16.msra.mxu0 %v162
    %208 = vmatprep.subr.bf16.mxu0 %v159
    %209 = vmatpush1.bf16.msra.mxu0 %v158
    %210 = vmatprep.subr.bf16.mxu0 0
    %211 = vmatpush2.bf16.msra.mxu0 0
    %212 = vmatprep.subr.bf16.mxu0 0
    %213 = vmatpush2.bf16.msra.mxu0 0
    %214 = vmatprep.subr.bf16.mxu0 0
    %215 = vmatpush2.bf16.msra.mxu0 0
    %216 = vmatprep.subr.bf16.mxu0 0
    %217 = vmatpush2.bf16.msra.mxu0 0
    %218 = vmatprep.subr.bf16.mxu0 0
    %219 = vmatpush2.bf16.msra.mxu0 0
    %220 = vmatprep.subr.bf16.mxu0 0
    %221 = vmatpush2.bf16.msra.mxu0 0
    %222 = vmatprep.subr.bf16.mxu0 0
    %223 = vmatpush2.bf16.msra.mxu0 0
    %224 = vmatprep.subr.bf16.mxu0 0
    %225 = vmatpush2.bf16.msra.mxu0 0
    %226 = vmatprep.mubr.bf16.mxu0 0
    %227 = vmatmul.mubr.bf16.gmra.mxu0 %v192
    %v228 = vpop.f32.mrf.mxu0
    %v229 = vadd.f32 %v93, %v228
    %v230 = vpop.f32.mrf.mxu0
    %v231 = vadd.f32 %v97, %v230
    %v232 = vpop.f32.mrf.mxu0
    %v233 = vpop.f32.mrf.mxu0
    %234 = vdwg.mxu0
    %235 = vmatprep.subr.bf16.mxu0 0
    %236 = vmatpush1.bf16.msra.mxu0 0
    %237 = vmatprep.subr.bf16.mxu0 0
    %238 = vmatpush1.bf16.msra.mxu0 0
    %239 = vmatprep.subr.bf16.mxu0 0
    %240 = vmatpush1.bf16.msra.mxu0 0
    %241 = vmatprep.subr.bf16.mxu0 0
    %242 = vmatpush1.bf16.msra.mxu0 0
    %243 = vmatprep.subr.bf16.mxu0 %v173
    %244 = vmatpush1.bf16.msra.mxu0 %v172
    %245 = vmatprep.subr.bf16.mxu0 %v169
    %246 = vmatpush1.bf16.msra.mxu0 %v168
    %247 = vmatprep.subr.bf16.mxu0 %v165
    %248 = vmatpush1.bf16.msra.mxu0 %v164
    %249 = vmatprep.subr.bf16.mxu0 %v161
    %250 = vmatpush1.bf16.msra.mxu0 %v160
    %251 = vmatprep.subr.bf16.mxu0 0
    %252 = vmatpush2.bf16.msra.mxu0 0
    %253 = vmatprep.subr.bf16.mxu0 0
    %254 = vmatpush2.bf16.msra.mxu0 0
    %255 = vmatprep.subr.bf16.mxu0 0
    %256 = vmatpush2.bf16.msra.mxu0 0
    %257 = vmatprep.subr.bf16.mxu0 0
    %258 = vmatpush2.bf16.msra.mxu0 0
    %259 = vmatprep.subr.bf16.mxu0 0
    %260 = vmatpush2.bf16.msra.mxu0 0
    %261 = vmatprep.subr.bf16.mxu0 0
    %262 = vmatpush2.bf16.msra.mxu0 0
    %263 = vmatprep.subr.bf16.mxu0 0
    %264 = vmatpush2.bf16.msra.mxu0 0
    %265 = vmatprep.subr.bf16.mxu0 0
    %266 = vmatpush2.bf16.msra.mxu0 0
    %267 = vmatprep.mubr.bf16.mxu0 0
    %268 = vmatmul.mubr.bf16.gmra.mxu0 %v192
    %v269 = vpop.f32.mrf.mxu0
    %v270 = vadd.f32 %v101, %v269
    %v271 = vpop.f32.mrf.mxu0
    %v272 = vadd.f32 %v105, %v271
    %v273 = vpop.f32.mrf.mxu0
    %v274 = vpop.f32.mrf.mxu0
    %275 = vdwg.mxu0
    %v276 = vmax.f32 %v229, 0.0
    %v277 = vmax.f32 %v231, 0.0
    %v278 = vmax.f32 %v270, 0.0
    %v279 = vmax.f32 %v272, 0.0
    %v280 = vpack.c.bf16 %v276, %v276
    %v281 = vpack.c.bf16 %v277, %v277
    %v282 = vpack.c.bf16 %v278, %v278
    %v283 = vpack.c.bf16 %v279, %v279
    %v284 = vld [vmem:[#allocation7] sm:$0xff]
    %v285 = vld [vmem:[#allocation7 + $0x8] sm:$0xff]
    %v286 = vld [vmem:[#allocation7 + $0x10] sm:$0xff]
    %v287 = vld [vmem:[#allocation7 + $0x18] sm:$0xff]
    %v288 = vld [vmem:[#allocation7 + $0x20] sm:$0xff]
    %v289 = vld [vmem:[#allocation7 + $0x28] sm:$0xff]
    %v290 = vld [vmem:[#allocation7 + $0x30] sm:$0xff]
    %v291 = vld [vmem:[#allocation7 + $0x38] sm:$0xff]
    %v292 = vld [vmem:[#allocation7 + $0x40] sm:$0xff]
    %v293 = vld [vmem:[#allocation7 + $0x48] sm:$0xff]
    %v294 = vld [vmem:[#allocation7 + $0x50] sm:$0xff]
    %v295 = vld [vmem:[#allocation7 + $0x58] sm:$0xff]
    %v296 = vld [vmem:[#allocation7 + $0x60] sm:$0xff]
    %v297 = vld [vmem:[#allocation7 + $0x68] sm:$0xff]
    %v298 = vld [vmem:[#allocation7 + $0x70] sm:$0xff]
    %v299 = vld [vmem:[#allocation7 + $0x78] sm:$0xff]
    %v300 = vld [vmem:[#allocation7 + $0x80] sm:$0xff]
    %v301 = vld [vmem:[#allocation7 + $0x88] sm:$0xff]
    %v302 = vld [vmem:[#allocation7 + $0x90] sm:$0xff]
    %v303 = vld [vmem:[#allocation7 + $0x98] sm:$0xff]
    %v304 = vld [vmem:[#allocation7 + $0xa0] sm:$0xff]
    %v305 = vld [vmem:[#allocation7 + $0xa8] sm:$0xff]
    %v306 = vld [vmem:[#allocation7 + $0xb0] sm:$0xff]
    %v307 = vld [vmem:[#allocation7 + $0xb8] sm:$0xff]
    %v308 = vld [vmem:[#allocation7 + $0xc0] sm:$0xff]
    %v309 = vld [vmem:[#allocation7 + $0xc8] sm:$0xff]
    %v310 = vld [vmem:[#allocation7 + $0xd0] sm:$0xff]
    %v311 = vld [vmem:[#allocation7 + $0xd8] sm:$0xff]
    %v312 = vld [vmem:[#allocation7 + $0xe0] sm:$0xff]
    %v313 = vld [vmem:[#allocation7 + $0xe8] sm:$0xff]
    %v314 = vld [vmem:[#allocation7 + $0xf0] sm:$0xff]
    %v315 = vld [vmem:[#allocation7 + $0xf8] sm:$0xff]
    %v316 = vld [vmem:[#allocation7 + $0x100] sm:$0xff]
    %v317 = vld [vmem:[#allocation7 + $0x108] sm:$0xff]
    %v318 = vld [vmem:[#allocation7 + $0x110] sm:$0xff]
    %v319 = vld [vmem:[#allocation7 + $0x118] sm:$0xff]
    %v320 = vld [vmem:[#allocation7 + $0x120] sm:$0xff]
    %v321 = vld [vmem:[#allocation7 + $0x128] sm:$0xff]
    %v322 = vld [vmem:[#allocation7 + $0x130] sm:$0xff]
    %v323 = vld [vmem:[#allocation7 + $0x138] sm:$0xff]
    %v324 = vld [vmem:[#allocation7 + $0x140] sm:$0xff]
    %v325 = vld [vmem:[#allocation7 + $0x148] sm:$0xff]
    %v326 = vld [vmem:[#allocation7 + $0x150] sm:$0xff]
    %v327 = vld [vmem:[#allocation7 + $0x158] sm:$0xff]
    %v328 = vld [vmem:[#allocation7 + $0x160] sm:$0xff]
    %v329 = vld [vmem:[#allocation7 + $0x168] sm:$0xff]
    %v330 = vld [vmem:[#allocation7 + $0x170] sm:$0xff]
    %v331 = vld [vmem:[#allocation7 + $0x178] sm:$0xff]
    %v332 = vld [vmem:[#allocation7 + $0x180] sm:$0xff]
    %v333 = vld [vmem:[#allocation7 + $0x188] sm:$0xff]
    %v334 = vld [vmem:[#allocation7 + $0x190] sm:$0xff]
    %v335 = vld [vmem:[#allocation7 + $0x198] sm:$0xff]
    %v336 = vld [vmem:[#allocation7 + $0x1a0] sm:$0xff]
    %v337 = vld [vmem:[#allocation7 + $0x1a8] sm:$0xff]
    %v338 = vld [vmem:[#allocation7 + $0x1b0] sm:$0xff]
    %v339 = vld [vmem:[#allocation7 + $0x1b8] sm:$0xff]
    %v340 = vld [vmem:[#allocation7 + $0x1c0] sm:$0xff]
    %v341 = vld [vmem:[#allocation7 + $0x1c8] sm:$0xff]
    %v342 = vld [vmem:[#allocation7 + $0x1d0] sm:$0xff]
    %v343 = vld [vmem:[#allocation7 + $0x1d8] sm:$0xff]
    %v344 = vld [vmem:[#allocation7 + $0x1e0] sm:$0xff]
    %v345 = vld [vmem:[#allocation7 + $0x1e8] sm:$0xff]
    %v346 = vld [vmem:[#allocation7 + $0x1f0] sm:$0xff]
    %v347 = vld [vmem:[#allocation7 + $0x1f8] sm:$0xff]
    %s348 = scalar_lea.vmem [#allocation8], 1
    %v349 = vld [vmem:[%s348] ss:$4 sm:$0x3]
    %v351 = vlaneseq
    %v352 = vshrl.u32 %v351, 7
    %v353 = vsub.s32 0, %v352
    %v354 = vrot.slane %v349, %v353
    %v355 = vlaneseq
    %v356 = vshrl.u32 %v355, 7
    %v357 = vsub.s32 1, %v356
    %v358 = vrot.slane %v349, %v357
    %v425 = vunpack.c.l.b16 %v284
    %v426 = vunpack.c.h.b16 %v284
    %v427 = vunpack.c.l.b16 %v285
    %v428 = vunpack.c.h.b16 %v285
    %v429 = vunpack.c.l.b16 %v286
    %v430 = vunpack.c.h.b16 %v286
    %v431 = vunpack.c.l.b16 %v287
    %v432 = vunpack.c.h.b16 %v287
    %v433 = vunpack.c.l.b16 %v288
    %v434 = vunpack.c.h.b16 %v288
    %v435 = vunpack.c.l.b16 %v289
    %v436 = vunpack.c.h.b16 %v289
    %v437 = vunpack.c.l.b16 %v290
    %v438 = vunpack.c.h.b16 %v290
    %v439 = vunpack.c.l.b16 %v291
    %v440 = vunpack.c.h.b16 %v291
    %v441 = vunpack.c.l.b16 %v292
    %v442 = vunpack.c.h.b16 %v292
    %v443 = vunpack.c.l.b16 %v293
    %v444 = vunpack.c.h.b16 %v293
    %v445 = vunpack.c.l.b16 %v294
    %v446 = vunpack.c.h.b16 %v294
    %v447 = vunpack.c.l.b16 %v295
    %v448 = vunpack.c.h.b16 %v295
    %v449 = vunpack.c.l.b16 %v296
    %v450 = vunpack.c.h.b16 %v296
    %v451 = vunpack.c.l.b16 %v297
    %v452 = vunpack.c.h.b16 %v297
    %v453 = vunpack.c.l.b16 %v298
    %v454 = vunpack.c.h.b16 %v298
    %v455 = vunpack.c.l.b16 %v299
    %v456 = vunpack.c.h.b16 %v299
    %v457 = vunpack.c.l.b16 %v300
    %v458 = vunpack.c.h.b16 %v300
    %v459 = vunpack.c.l.b16 %v301
    %v460 = vunpack.c.h.b16 %v301
    %v461 = vunpack.c.l.b16 %v302
    %v462 = vunpack.c.h.b16 %v302
    %v463 = vunpack.c.l.b16 %v303
    %v464 = vunpack.c.h.b16 %v303
    %v465 = vunpack.c.l.b16 %v304
    %v466 = vunpack.c.h.b16 %v304
    %v467 = vunpack.c.l.b16 %v305
    %v468 = vunpack.c.h.b16 %v305
    %v469 = vunpack.c.l.b16 %v306
    %v470 = vunpack.c.h.b16 %v306
    %v471 = vunpack.c.l.b16 %v307
    %v472 = vunpack.c.h.b16 %v307
    %v473 = vunpack.c.l.b16 %v308
    %v474 = vunpack.c.h.b16 %v308
    %v475 = vunpack.c.l.b16 %v309
    %v476 = vunpack.c.h.b16 %v309
    %v477 = vunpack.c.l.b16 %v310
    %v478 = vunpack.c.h.b16 %v310
    %v479 = vunpack.c.l.b16 %v311
    %v480 = vunpack.c.h.b16 %v311
    %v481 = vunpack.c.l.b16 %v312
    %v482 = vunpack.c.h.b16 %v312
    %v483 = vunpack.c.l.b16 %v313
    %v484 = vunpack.c.h.b16 %v313
    %v485 = vunpack.c.l.b16 %v314
    %v486 = vunpack.c.h.b16 %v314
    %v487 = vunpack.c.l.b16 %v315
    %v488 = vunpack.c.h.b16 %v315
    %v489 = vunpack.c.l.b16 %v316
    %v490 = vunpack.c.h.b16 %v316
    %v491 = vunpack.c.l.b16 %v317
    %v492 = vunpack.c.h.b16 %v317
    %v493 = vunpack.c.l.b16 %v318
    %v494 = vunpack.c.h.b16 %v318
    %v495 = vunpack.c.l.b16 %v319
    %v496 = vunpack.c.h.b16 %v319
    %v497 = vunpack.c.l.b16 %v320
    %v498 = vunpack.c.h.b16 %v320
    %v499 = vunpack.c.l.b16 %v321
    %v500 = vunpack.c.h.b16 %v321
    %v501 = vunpack.c.l.b16 %v322
    %v502 = vunpack.c.h.b16 %v322
    %v503 = vunpack.c.l.b16 %v323
    %v504 = vunpack.c.h.b16 %v323
    %v505 = vunpack.c.l.b16 %v324
    %v506 = vunpack.c.h.b16 %v324
    %v507 = vunpack.c.l.b16 %v325
    %v508 = vunpack.c.h.b16 %v325
    %v509 = vunpack.c.l.b16 %v326
    %v510 = vunpack.c.h.b16 %v326
    %v511 = vunpack.c.l.b16 %v327
    %v512 = vunpack.c.h.b16 %v327
    %v513 = vunpack.c.l.b16 %v328
    %v514 = vunpack.c.h.b16 %v328
    %v515 = vunpack.c.l.b16 %v329
    %v516 = vunpack.c.h.b16 %v329
    %v517 = vunpack.c.l.b16 %v330
    %v518 = vunpack.c.h.b16 %v330
    %v519 = vunpack.c.l.b16 %v331
    %v520 = vunpack.c.h.b16 %v331
    %v521 = vunpack.c.l.b16 %v332
    %v522 = vunpack.c.h.b16 %v332
    %v523 = vunpack.c.l.b16 %v333
    %v524 = vunpack.c.h.b16 %v333
    %v525 = vunpack.c.l.b16 %v334
    %v526 = vunpack.c.h.b16 %v334
    %v527 = vunpack.c.l.b16 %v335
    %v528 = vunpack.c.h.b16 %v335
    %v529 = vunpack.c.l.b16 %v336
    %v530 = vunpack.c.h.b16 %v336
    %v531 = vunpack.c.l.b16 %v337
    %v532 = vunpack.c.h.b16 %v337
    %v533 = vunpack.c.l.b16 %v338
    %v534 = vunpack.c.h.b16 %v338
    %v535 = vunpack.c.l.b16 %v339
    %v536 = vunpack.c.h.b16 %v339
    %v537 = vunpack.c.l.b16 %v340
    %v538 = vunpack.c.h.b16 %v340
    %v539 = vunpack.c.l.b16 %v341
    %v540 = vunpack.c.h.b16 %v341
    %v541 = vunpack.c.l.b16 %v342
    %v542 = vunpack.c.h.b16 %v342
    %v543 = vunpack.c.l.b16 %v343
    %v544 = vunpack.c.h.b16 %v343
    %v545 = vunpack.c.l.b16 %v344
    %v546 = vunpack.c.h.b16 %v344
    %v547 = vunpack.c.l.b16 %v345
    %v548 = vunpack.c.h.b16 %v345
    %v549 = vunpack.c.l.b16 %v346
    %v550 = vunpack.c.h.b16 %v346
    %v551 = vunpack.c.l.b16 %v347
    %v552 = vunpack.c.h.b16 %v347
    %v553 = vpack.c.b16 %v427, %v425
    %v554 = vpack.c.b16 %v428, %v426
    %v555 = vpack.c.b16 %v431, %v429
    %v556 = vpack.c.b16 %v432, %v430
    %v557 = vpack.c.b16 %v435, %v433
    %v558 = vpack.c.b16 %v436, %v434
    %v559 = vpack.c.b16 %v439, %v437
    %v560 = vpack.c.b16 %v440, %v438
    %v561 = vpack.c.b16 %v443, %v441
    %v562 = vpack.c.b16 %v444, %v442
    %v563 = vpack.c.b16 %v447, %v445
    %v564 = vpack.c.b16 %v448, %v446
    %v565 = vpack.c.b16 %v451, %v449
    %v566 = vpack.c.b16 %v452, %v450
    %v567 = vpack.c.b16 %v455, %v453
    %v568 = vpack.c.b16 %v456, %v454
    %v569 = vpack.c.b16 %v459, %v457
    %v570 = vpack.c.b16 %v460, %v458
    %v571 = vpack.c.b16 %v463, %v461
    %v572 = vpack.c.b16 %v464, %v462
    %v573 = vpack.c.b16 %v467, %v465
    %v574 = vpack.c.b16 %v468, %v466
    %v575 = vpack.c.b16 %v471, %v469
    %v576 = vpack.c.b16 %v472, %v470
    %v577 = vpack.c.b16 %v475, %v473
    %v578 = vpack.c.b16 %v476, %v474
    %v579 = vpack.c.b16 %v479, %v477
    %v580 = vpack.c.b16 %v480, %v478
    %v581 = vpack.c.b16 %v483, %v481
    %v582 = vpack.c.b16 %v484, %v482
    %v583 = vpack.c.b16 %v487, %v485
    %v584 = vpack.c.b16 %v488, %v486
    %v585 = vpack.c.b16 %v491, %v489
    %v586 = vpack.c.b16 %v492, %v490
    %v587 = vpack.c.b16 %v495, %v493
    %v588 = vpack.c.b16 %v496, %v494
    %v589 = vpack.c.b16 %v499, %v497
    %v590 = vpack.c.b16 %v500, %v498
    %v591 = vpack.c.b16 %v503, %v501
    %v592 = vpack.c.b16 %v504, %v502
    %v593 = vpack.c.b16 %v507, %v505
    %v594 = vpack.c.b16 %v508, %v506
    %v595 = vpack.c.b16 %v511, %v509
    %v596 = vpack.c.b16 %v512, %v510
    %v597 = vpack.c.b16 %v515, %v513
    %v598 = vpack.c.b16 %v516, %v514
    %v599 = vpack.c.b16 %v519, %v517
    %v600 = vpack.c.b16 %v520, %v518
    %v601 = vpack.c.b16 %v523, %v521
    %v602 = vpack.c.b16 %v524, %v522
    %v603 = vpack.c.b16 %v527, %v525
    %v604 = vpack.c.b16 %v528, %v526
    %v605 = vpack.c.b16 %v531, %v529
    %v606 = vpack.c.b16 %v532, %v530
    %v607 = vpack.c.b16 %v535, %v533
    %v608 = vpack.c.b16 %v536, %v534
    %v609 = vpack.c.b16 %v539, %v537
    %v610 = vpack.c.b16 %v540, %v538
    %v611 = vpack.c.b16 %v543, %v541
    %v612 = vpack.c.b16 %v544, %v542
    %v613 = vpack.c.b16 %v547, %v545
    %v614 = vpack.c.b16 %v548, %v546
    %v615 = vpack.c.b16 %v551, %v549
    %v616 = vpack.c.b16 %v552, %v550
    %681 = vmatprep.subr.bf16.mxu0 %v568
    %682 = vmatpush1.bf16.msra.mxu0 %v567
    %683 = vmatprep.subr.bf16.mxu0 %v566
    %684 = vmatpush1.bf16.msra.mxu0 %v565
    %685 = vmatprep.subr.bf16.mxu0 %v564
    %686 = vmatpush1.bf16.msra.mxu0 %v563
    %687 = vmatprep.subr.bf16.mxu0 %v562
    %688 = vmatpush1.bf16.msra.mxu0 %v561
    %689 = vmatprep.subr.bf16.mxu0 %v560
    %690 = vmatpush1.bf16.msra.mxu0 %v559
    %691 = vmatprep.subr.bf16.mxu0 %v558
    %692 = vmatpush1.bf16.msra.mxu0 %v557
    %693 = vmatprep.subr.bf16.mxu0 %v556
    %694 = vmatpush1.bf16.msra.mxu0 %v555
    %695 = vmatprep.subr.bf16.mxu0 %v554
    %696 = vmatpush1.bf16.msra.mxu0 %v553
    %697 = vmatprep.subr.bf16.mxu0 %v584
    %698 = vmatpush2.bf16.msra.mxu0 %v583
    %699 = vmatprep.subr.bf16.mxu0 %v582
    %700 = vmatpush2.bf16.msra.mxu0 %v581
    %701 = vmatprep.subr.bf16.mxu0 %v580
    %702 = vmatpush2.bf16.msra.mxu0 %v579
    %703 = vmatprep.subr.bf16.mxu0 %v578
    %704 = vmatpush2.bf16.msra.mxu0 %v577
    %705 = vmatprep.subr.bf16.mxu0 %v576
    %706 = vmatpush2.bf16.msra.mxu0 %v575
    %707 = vmatprep.subr.bf16.mxu0 %v574
    %708 = vmatpush2.bf16.msra.mxu0 %v573
    %709 = vmatprep.subr.bf16.mxu0 %v572
    %710 = vmatpush2.bf16.msra.mxu0 %v571
    %711 = vmatprep.subr.bf16.mxu0 %v570
    %712 = vmatpush2.bf16.msra.mxu0 %v569
    %713 = vmatprep.mubr.bf16.mxu0 %v281
    %714 = vmatmul.mubr.bf16.gmra.mxu0 %v280
    %v715 = vpop.f32.mrf.mxu0
    %v716 = vadd.f32 %v354, %v715
    %v717 = vpop.f32.mrf.mxu0
    %v718 = vadd.f32 %v358, %v717
    %v719 = vpop.f32.mrf.mxu0
    %v720 = vpop.f32.mrf.mxu0
    %721 = vdwg.mxu0
    %722 = vmatprep.subr.bf16.mxu0 %v600
    %723 = vmatpush1.bf16.msra.mxu0 %v599
    %724 = vmatprep.subr.bf16.mxu0 %v598
    %725 = vmatpush1.bf16.msra.mxu0 %v597
    %726 = vmatprep.subr.bf16.mxu0 %v596
    %727 = vmatpush1.bf16.msra.mxu0 %v595
    %728 = vmatprep.subr.bf16.mxu0 %v594
    %729 = vmatpush1.bf16.msra.mxu0 %v593
    %730 = vmatprep.subr.bf16.mxu0 %v592
    %731 = vmatpush1.bf16.msra.mxu0 %v591
    %732 = vmatprep.subr.bf16.mxu0 %v590
    %733 = vmatpush1.bf16.msra.mxu0 %v589
    %734 = vmatprep.subr.bf16.mxu0 %v588
    %735 = vmatpush1.bf16.msra.mxu0 %v587
    %736 = vmatprep.subr.bf16.mxu0 %v586
    %737 = vmatpush1.bf16.msra.mxu0 %v585
    %738 = vmatprep.subr.bf16.mxu0 %v616
    %739 = vmatpush2.bf16.msra.mxu0 %v615
    %740 = vmatprep.subr.bf16.mxu0 %v614
    %741 = vmatpush2.bf16.msra.mxu0 %v613
    %742 = vmatprep.subr.bf16.mxu0 %v612
    %743 = vmatpush2.bf16.msra.mxu0 %v611
    %744 = vmatprep.subr.bf16.mxu0 %v610
    %745 = vmatpush2.bf16.msra.mxu0 %v609
    %746 = vmatprep.subr.bf16.mxu0 %v608
    %747 = vmatpush2.bf16.msra.mxu0 %v607
    %748 = vmatprep.subr.bf16.mxu0 %v606
    %749 = vmatpush2.bf16.msra.mxu0 %v605
    %750 = vmatprep.subr.bf16.mxu0 %v604
    %751 = vmatpush2.bf16.msra.mxu0 %v603
    %752 = vmatprep.subr.bf16.mxu0 %v602
    %753 = vmatpush2.bf16.msra.mxu0 %v601
    %754 = vmatprep.mubr.bf16.mxu0 %v283
    %755 = vmatmul.mubr.bf16.gmra.mxu0 %v282
    %v756 = vpop.f32.mrf.mxu0
    %v757 = vadd.f32 %v716, %v756
    %v758 = vpop.f32.mrf.mxu0
    %v759 = vadd.f32 %v718, %v758
    %v760 = vpop.f32.mrf.mxu0
    %v761 = vpop.f32.mrf.mxu0
    %762 = vdwg.mxu0
    %v763 = vmax.f32 %v757, 0.0
    %v764 = vmax.f32 %v759, 0.0
    %v765 = vpack.c.bf16 %v763, %v763
    %v766 = vpack.c.bf16 %v764, %v764
    %v767 = vld [vmem:[#allocation7 + $0x200] sm:$0xf]
    %v768 = vld [vmem:[#allocation7 + $0x208] sm:$0xf]
    %v769 = vld [vmem:[#allocation7 + $0x210] sm:$0xf]
    %v770 = vld [vmem:[#allocation7 + $0x218] sm:$0xf]
    %v771 = vld [vmem:[#allocation7 + $0x220] sm:$0xf]
    %v772 = vld [vmem:[#allocation7 + $0x228] sm:$0xf]
    %v773 = vld [vmem:[#allocation7 + $0x230] sm:$0xf]
    %v774 = vld [vmem:[#allocation7 + $0x238] sm:$0xf]
    %v775 = vld [vmem:[#allocation7 + $0x240] sm:$0xf]
    %v776 = vld [vmem:[#allocation7 + $0x248] sm:$0xf]
    %v777 = vld [vmem:[#allocation7 + $0x250] sm:$0xf]
    %v778 = vld [vmem:[#allocation7 + $0x258] sm:$0xf]
    %v779 = vld [vmem:[#allocation7 + $0x260] sm:$0xf]
    %v780 = vld [vmem:[#allocation7 + $0x268] sm:$0xf]
    %v781 = vld [vmem:[#allocation7 + $0x270] sm:$0xf]
    %v782 = vld [vmem:[#allocation7 + $0x278] sm:$0xf]
    %v783 = vld [vmem:[#allocation7 + $0x280] sm:$0xf]
    %v784 = vld [vmem:[#allocation7 + $0x288] sm:$0xf]
    %v785 = vld [vmem:[#allocation7 + $0x290] sm:$0xf]
    %v786 = vld [vmem:[#allocation7 + $0x298] sm:$0xf]
    %v787 = vld [vmem:[#allocation7 + $0x2a0] sm:$0xf]
    %v788 = vld [vmem:[#allocation7 + $0x2a8] sm:$0xf]
    %v789 = vld [vmem:[#allocation7 + $0x2b0] sm:$0xf]
    %v790 = vld [vmem:[#allocation7 + $0x2b8] sm:$0xf]
    %v791 = vld [vmem:[#allocation7 + $0x2c0] sm:$0xf]
    %v792 = vld [vmem:[#allocation7 + $0x2c8] sm:$0xf]
    %v793 = vld [vmem:[#allocation7 + $0x2d0] sm:$0xf]
    %v794 = vld [vmem:[#allocation7 + $0x2d8] sm:$0xf]
    %v795 = vld [vmem:[#allocation7 + $0x2e0] sm:$0xf]
    %v796 = vld [vmem:[#allocation7 + $0x2e8] sm:$0xf]
    %v797 = vld [vmem:[#allocation7 + $0x2f0] sm:$0xf]
    %v798 = vld [vmem:[#allocation7 + $0x2f8] sm:$0xf]
    %v799 = vld [vmem:[#allocation8 + $0x2] sm:$0x1]
    %v800 = vlaneseq
    %v801 = vshrl.u32 %v800, 7
    %v802 = vsub.s32 0, %v801
    %v803 = vrot.slane %v799, %v802
    %v836 = vunpack.c.l.b16 %v767
    %v837 = vunpack.c.l.b16 %v768
    %v838 = vunpack.c.l.b16 %v769
    %v839 = vunpack.c.l.b16 %v770
    %v840 = vunpack.c.l.b16 %v771
    %v841 = vunpack.c.l.b16 %v772
    %v842 = vunpack.c.l.b16 %v773
    %v843 = vunpack.c.l.b16 %v774
    %v844 = vunpack.c.l.b16 %v775
    %v845 = vunpack.c.l.b16 %v776
    %v846 = vunpack.c.l.b16 %v777
    %v847 = vunpack.c.l.b16 %v778
    %v848 = vunpack.c.l.b16 %v779
    %v849 = vunpack.c.l.b16 %v780
    %v850 = vunpack.c.l.b16 %v781
    %v851 = vunpack.c.l.b16 %v782
    %v852 = vunpack.c.l.b16 %v783
    %v853 = vunpack.c.l.b16 %v784
    %v854 = vunpack.c.l.b16 %v785
    %v855 = vunpack.c.l.b16 %v786
    %v856 = vunpack.c.l.b16 %v787
    %v857 = vunpack.c.l.b16 %v788
    %v858 = vunpack.c.l.b16 %v789
    %v859 = vunpack.c.l.b16 %v790
    %v860 = vunpack.c.l.b16 %v791
    %v861 = vunpack.c.l.b16 %v792
    %v862 = vunpack.c.l.b16 %v793
    %v863 = vunpack.c.l.b16 %v794
    %v864 = vunpack.c.l.b16 %v795
    %v865 = vunpack.c.l.b16 %v796
    %v866 = vunpack.c.l.b16 %v797
    %v867 = vunpack.c.l.b16 %v798
    %v868 = vpack.c.b16 %v837, %v836
    %v869 = vpack.c.b16 %v839, %v838
    %v870 = vpack.c.b16 %v841, %v840
    %v871 = vpack.c.b16 %v843, %v842
    %v872 = vpack.c.b16 %v845, %v844
    %v873 = vpack.c.b16 %v847, %v846
    %v874 = vpack.c.b16 %v849, %v848
    %v875 = vpack.c.b16 %v851, %v850
    %v876 = vpack.c.b16 %v853, %v852
    %v877 = vpack.c.b16 %v855, %v854
    %v878 = vpack.c.b16 %v857, %v856
    %v879 = vpack.c.b16 %v859, %v858
    %v880 = vpack.c.b16 %v861, %v860
    %v881 = vpack.c.b16 %v863, %v862
    %v882 = vpack.c.b16 %v865, %v864
    %v883 = vpack.c.b16 %v867, %v866
    %900 = vmatprep.subr.bf16.mxu0 0
    %901 = vmatpush1.bf16.msra.mxu0 %v875
    %902 = vmatprep.subr.bf16.mxu0 0
    %903 = vmatpush1.bf16.msra.mxu0 %v874
    %904 = vmatprep.subr.bf16.mxu0 0
    %905 = vmatpush1.bf16.msra.mxu0 %v873
    %906 = vmatprep.subr.bf16.mxu0 0
    %907 = vmatpush1.bf16.msra.mxu0 %v872
    %908 = vmatprep.subr.bf16.mxu0 0
    %909 = vmatpush1.bf16.msra.mxu0 %v871
    %910 = vmatprep.subr.bf16.mxu0 0
    %911 = vmatpush1.bf16.msra.mxu0 %v870
    %912 = vmatprep.subr.bf16.mxu0 0
    %913 = vmatpush1.bf16.msra.mxu0 %v869
    %914 = vmatprep.subr.bf16.mxu0 0
    %915 = vmatpush1.bf16.msra.mxu0 %v868
    %916 = vmatprep.subr.bf16.mxu0 0
    %917 = vmatpush2.bf16.msra.mxu0 %v883
    %918 = vmatprep.subr.bf16.mxu0 0
    %919 = vmatpush2.bf16.msra.mxu0 %v882
    %920 = vmatprep.subr.bf16.mxu0 0
    %921 = vmatpush2.bf16.msra.mxu0 %v881
    %922 = vmatprep.subr.bf16.mxu0 0
    %923 = vmatpush2.bf16.msra.mxu0 %v880
    %924 = vmatprep.subr.bf16.mxu0 0
    %925 = vmatpush2.bf16.msra.mxu0 %v879
    %926 = vmatprep.subr.bf16.mxu0 0
    %927 = vmatpush2.bf16.msra.mxu0 %v878
    %928 = vmatprep.subr.bf16.mxu0 0
    %929 = vmatpush2.bf16.msra.mxu0 %v877
    %930 = vmatprep.subr.bf16.mxu0 0
    %931 = vmatpush2.bf16.msra.mxu0 %v876
    %932 = vmatprep.mubr.bf16.mxu0 %v766
    %933 = vmatmul.mubr.bf16.gmra.mxu0 %v765
    %v934 = vpop.f32.mrf.mxu0
    %v935 = vadd.f32 %v803, %v934
    %v936 = vpop.f32.mrf.mxu0
    %v937 = vpop.f32.mrf.mxu0
    %v938 = vpop.f32.mrf.mxu0
    %939 = vdwg.mxu0
    %v940 = vmax.f32 %v935, 0.0
    %941 = vst [vmem:[#allocation10] sm:$0xff] %v940
    // Predicated region
    $region34: #{mlp_forward.1} parent=1 // pred_check
      _
    $region35: #{mlp_forward.1} parent=1 // pred_check_branch
      %943 = sbr.rel (0) target = $region37
    $region36: #{mlp_forward.1} parent=1 // pred_region
      %s945 = ssub.s32 128, 128
      %946 = vsyncadd [#allocation4], %s945
      %s948 = sshll.u32 [#allocation10], 4
      %s949 = int_to_ptr.vmem [resolvable:$true] %s948
      %951 = dma.vmem_to_hbm [thread:$0]  %s949, 128, %s4, [#allocation4]
    $region37: #{mlp_forward.1} parent=1 // pred_fallthru
      _
    // Predicated region
    $region38: #{mlp_forward.1} parent=1 // pred_check
      _
    $region39: #{mlp_forward.1} parent=1 // pred_check_branch
      %953 = sbr.rel (0) target = $region41
    $region40: #{mlp_forward.1} parent=1 // pred_region
      %954 = dma.done [#allocation4], 128
    $region41: #{mlp_forward.1} parent=1 // pred_fallthru
      _
    %955 = vsyncpa [#allocation3], 1
    %956 = vsyncpa [#allocation6], 1
    %957 = vsyncpa [#allocation9], 1
    %958 = vsyncpa [#allocation4], 1

</llo_original>
